<compile_context>
chip_gen: v6e
topology: v6e:2x2x1
jax: 0.10.0
libtpu: 0.0.40
codegen_flags: <defaults>
</compile_context>

<pallas_src>
import functools

import jax
import jax.numpy as jnp
from jax import lax
from jax.experimental import pallas as pl
from jax.experimental.pallas import tpu as pltpu

EPS = 1e-5


def _efe_mlp_kernel(x_ref, w1_ref, g1_ref, bt1_ref, w2_ref, g2_ref, bt2_ref,
                    out_ref, *, nsample, mm_dtype):
    """x_ref: [C0, L] (L = M*nsample); w*: [Cout, Cin]; g/bt: [C, 1]; out: [C2, M]."""
    _, L = x_ref.shape
    _, M = out_ref.shape
    inv_r = 1.0 / float(L)                 # BN reduces over all B*S*nsample positions

    def conv(w_ref, h):
        # 1x1 Conv2d == one MXU matmul [Cout, Cin] @ [Cin, L]; L stays lane-dense.
        # Conv bias omitted: exactly cancelled by the BN mean subtraction.
        return lax.dot_general(
            w_ref[...], h.astype(mm_dtype),
            dimension_numbers=(((1,), (0,)), ((), ())),
            preferred_element_type=jnp.float32)

    def bn_fold(h, g_ref, bt_ref):
        # Train-mode BatchNorm2d (batch stats, biased variance, eps=1e-5) folded
        # into a per-channel scale/shift.  Stats are single XLU lane reduces.
        s = jnp.sum(h, axis=1, keepdims=True)               # [C, 1]
        q = jnp.sum(h * h, axis=1, keepdims=True)           # [C, 1]
        mean = s * inv_r
        var = jnp.maximum(q * inv_r - mean * mean, 0.0)     # clamp f32 cancellation
        scale = g_ref[...] * lax.rsqrt(var + EPS)
        shift = bt_ref[...] - mean * scale
        return scale, shift

    # ---- layer 1: conv -> BN + ReLU applied elementwise (feeds the next matmul) ----
    h1 = conv(w1_ref, x_ref[...])                           # [C1, L] f32
    sc1, sh1 = bn_fold(h1, g1_ref, bt1_ref)
    h1 = jnp.maximum(h1 * sc1 + sh1, 0.0)                   # fused normalize+affine+ReLU

    # ---- layer 2: conv -> BN + ReLU folded into the max over nsample ----
    h2 = conv(w2_ref, h1)                                   # [C2, L] f32
    sc2, sh2 = bn_fold(h2, g2_ref, bt2_ref)

    # torch.max over nsample == per-segment lane reduce.  ReLU o (monotone
    # affine) commutes with max (min branch for a negative scale), so the
    # affine + ReLU runs on the reduced [C2, 1] columns, not the [C2, L] slab.
    for m in range(M):                                      # static unroll; M = B*S (small)
        seg = h2[:, m * nsample:(m + 1) * nsample]          # aligned lane slice, no copy
        segmax = jnp.max(seg, axis=1, keepdims=True)        # [C2, 1]  (XLU)
        segmin = jnp.min(seg, axis=1, keepdims=True)        # [C2, 1]  (XLU)
        folded = jnp.where(sc2 >= 0.0, sc2 * segmax, sc2 * segmin) + sh2
        out_ref[:, m:m + 1] = jnp.maximum(folded, 0.0)


def _vmem_spec():
    return pl.BlockSpec(memory_space=pltpu.MemorySpace.VMEM)


def _vmem_budget_bytes():
    """Generation-aware scoped-VMEM cap with headroom (~48 MiB v7x, ~96 MiB v5e/v6e)."""
    phys = 64 * 1024 * 1024                    # conservative default: v7x per-core VMEM
    try:
        info = pltpu.get_tpu_info()
        phys = int(getattr(info, "vmem_capacity_bytes", phys)) or phys
    except Exception:
        pass
    return max(32 * 1024 * 1024, min((3 * phys) // 4, phys - 16 * 1024 * 1024))


def efe_mlp_pallas(x2, params, *, nsample, matmul_dtype=jnp.float32):
    """x2: [C0, M*nsample] (channels on sublanes, batch*nsample lane-dense).

    Returns [C2, M] (channels on sublanes, M lane-dense); caller transposes back.
    """
    C0, L = x2.shape
    assert L % nsample == 0
    M = L // nsample
    C1 = params["w1"].shape[1]
    C2 = params["w2"].shape[1]

    # Layout / dtype plumbing stays in the wrapper (XLA work, no in-kernel copies).
    x2 = x2.astype(matmul_dtype)
    w1t = params["w1"].T.astype(matmul_dtype)               # [C1, C0]
    w2t = params["w2"].T.astype(matmul_dtype)               # [C2, C1]
    g1 = params["g1"].reshape(C1, 1)
    bt1 = params["bt1"].reshape(C1, 1)
    g2 = params["g2"].reshape(C2, 1)
    bt2 = params["bt2"].reshape(C2, 1)
    args = (x2, w1t, g1, bt1, w2t, g2, bt2)

    # Advisory cost estimate for XLA scheduling around the custom call.
    in_bytes = sum(int(a.size) * a.dtype.itemsize for a in args)
    cost = pl.CostEstimate(flops=2 * L * (C0 * C1 + C1 * C2),
                           transcendentals=C1 + C2,          # rsqrt per channel
                           bytes_accessed=in_bytes + 4 * C2 * M)

    # Explicit resident-byte estimate: x (matmul dtype), h1/h2 in f32, one f32
    # elementwise temporary of the widest layer, optional bf16 copy of h1.
    itemsize = x2.dtype.itemsize
    resident = (itemsize * C0 * L
                + 4 * L * (C1 + C2 + max(C1, C2))
                + (2 * C1 * L if itemsize < 4 else 0)
                + (1 << 20))
    cap = _vmem_budget_bytes()
    vmem_limit = int(max(32 * 1024 * 1024, min(cap, (5 * resident) // 4)))
    # TODO(synk): if resident > cap, switch to a tiled grid with a two-phase
    # global-BN accumulator instead of a single VMEM-resident block.

    kernel = functools.partial(_efe_mlp_kernel, nsample=nsample, mm_dtype=matmul_dtype)
    return pl.pallas_call(
        kernel,
        out_shape=jax.ShapeDtypeStruct((C2, M), jnp.float32),
        in_specs=[_vmem_spec() for _ in args],
        out_specs=_vmem_spec(),
        compiler_params=pltpu.CompilerParams(vmem_limit_bytes=vmem_limit),
        cost_estimate=cost,
    )(*args)


def sample_and_group_all(xy, events):
    """Exact JAX mirror of the torch sample_and_group_all (group_all=True path)."""
    B, N, C = xy.shape
    new_xy = jnp.zeros((B, 1, C), xy.dtype)
    grouped_xy = xy.reshape(B, 1, N, C)
    if events is not None:
        new_events = jnp.concatenate(
            [grouped_xy, events.reshape(B, 1, N, -1)], axis=-1)
    else:
        new_events = grouped_xy
    return new_xy, new_events


def aernet_efe_forward(xy, events, params, group_all=True, matmul_dtype=jnp.float32):
    """Forward pass of AERNet_EFE.

    xy:     [B, N, 2]
    events: [B, N, D]
    returns (new_xy [B, S, 2], new_events [B, S, mlp[-1]])
    """
    if not group_all:
        # TODO(synk): Surface_Event_Sample / research_circle path uses host-side
        # np.unique + torch.randint (nondeterministic, data-dependent); not
        # translated to Pallas.
        raise NotImplementedError("only group_all=True is implemented")

    new_xy, new_events = sample_and_group_all(xy, events)       # [B, S=1, N, C0]
    B, S, NS, C0 = new_events.shape
    # channels -> sublanes; (B*S, nsample) merged lane-dense: [C0, B*S*NS].
    x2 = jnp.transpose(new_events, (3, 0, 1, 2)).reshape(C0, B * S * NS)
    out_cm = efe_mlp_pallas(x2, params, nsample=NS,
                            matmul_dtype=matmul_dtype)           # [C2, B*S]
    return new_xy, out_cm.T.reshape(B, S, -1)


def _reference_forward(xy, events, params):
    """Plain-JAX reference mirroring the PyTorch math exactly (bias + two-pass BN)."""
    new_xy, new_events = sample_and_group_all(xy, events)
    B, S, NS, C0 = new_events.shape
    h = new_events.reshape(B * S * NS, C0).astype(jnp.float32)
    for (w, b, g, bt) in ((params["w1"], params["b1"], params["g1"], params["bt1"]),
                          (params["w2"], params["b2"], params["g2"], params["bt2"])):
        h = h @ w + b
        mean = jnp.mean(h, axis=0, keepdims=True)
        var = jnp.mean((h - mean) ** 2, axis=0, keepdims=True)
        h = (h - mean) / jnp.sqrt(var + EPS) * g + bt
        h = jnp.maximum(h, 0.0)
    h = h.reshape(B * S, NS, -1).max(axis=1)
    return new_xy, h.reshape(B, S, -1)


def make_params(key, in_channel, mlp):
    """Deterministic parameter init matching the module's shapes.

    Conv2d(last, out, 1) weight [out, in, 1, 1] is stored here as [in, out]
    (its 1x1-conv transpose); the wrapper re-transposes to [out, in].
    BatchNorm2d: gamma=1, beta=0 (PyTorch default).  Conv biases are kept for
    the reference but are mathematically cancelled by train-mode BN.
    """
    k1, k2 = jax.random.split(key)
    c0, c1, c2 = in_channel, mlp[0], mlp[1]
    return {
        "w1": jax.random.normal(k1, (c0, c1), jnp.float32) * 0.1,
        "b1": jnp.linspace(-0.1, 0.1, c1, dtype=jnp.float32).reshape(1, c1),
        "g1": jnp.ones((1, c1), jnp.float32),
        "bt1": jnp.zeros((1, c1), jnp.float32),
        "w2": jax.random.normal(k2, (c1, c2), jnp.float32) * 0.1,
        "b2": jnp.linspace(-0.1, 0.1, c2, dtype=jnp.float32).reshape(1, c2),
        "g2": jnp.ones((1, c2), jnp.float32),
        "bt2": jnp.zeros((1, c2), jnp.float32),
    }


if __name__ == "__main__":
    # Shapes consistent with the module: xy [B, N, 2] in [0,1), events [B, N, D];
    # in_channel = 2 + D (sample_and_group_all concatenates xy onto events).
    # N is a lane multiple (256) so batch*nsample maps cleanly onto lanes.
    B, N, D = 2, 256, 2
    in_channel = 2 + D
    mlp = [32, 64]

    key = jax.random.PRNGKey(0)
    kxy, kev, kp = jax.random.split(key, 3)
    xy = jax.random.uniform(kxy, (B, N, 2), jnp.float32)
    events = jax.random.normal(kev, (B, N, D), jnp.float32)
    params = make_params(kp, in_channel, mlp)

    # f32 path: matches the PyTorch module's forward math.
    new_xy, new_events = aernet_efe_forward(xy, events, params, group_all=True)
    new_xy = jax.block_until_ready(new_xy)
    new_events = jax.block_until_ready(new_events)

    ref_xy, ref_events = _reference_forward(xy, events, params)
    assert new_xy.shape == (B, 1, 2)
    assert new_events.shape == (B, 1, mlp[-1])
    assert jnp.allclose(new_xy, ref_xy)
    assert jnp.allclose(new_events, ref_events, atol=1e-4, rtol=1e-4)

    # bf16 matmul-operand path (MXU-native on v6e/v7x, halves x DMA); BN stats,
    # normalize/ReLU and the output stay f32 — validated with a loose tolerance.
    _, ev_bf16 = aernet_efe_forward(xy, events, params, group_all=True,
                                    matmul_dtype=jnp.bfloat16)
    ev_bf16 = jax.block_until_ready(ev_bf16)
    assert ev_bf16.shape == (B, 1, mlp[-1])
    assert jnp.allclose(ev_bf16, ref_events, atol=1e-1, rtol=1e-1)

    print("KERNEL_OK")
</pallas_src>

<mosaic_0001>
module attributes {stable_mosaic.version = 11 : i64} {
  func.func @_efe_mlp_kernel(%arg0: memref<4x512xf32, #tpu.memory_space<vmem>>, %arg1: memref<32x4xf32, #tpu.memory_space<vmem>>, %arg2: memref<32x1xf32, #tpu.memory_space<vmem>>, %arg3: memref<32x1xf32, #tpu.memory_space<vmem>>, %arg4: memref<64x32xf32, #tpu.memory_space<vmem>>, %arg5: memref<64x1xf32, #tpu.memory_space<vmem>>, %arg6: memref<64x1xf32, #tpu.memory_space<vmem>>, %arg7: memref<64x2xf32, #tpu.memory_space<vmem>>) attributes {dimension_semantics = [], scalar_prefetch = 0 : i64, scratch_operands = 0 : i64, tpu.core_type = #tpu.core_type<tc>} {
    %c0 = arith.constant 0 : index
    %c0_0 = arith.constant 0 : index
    %0 = vector.load %arg0[%c0, %c0_0] : memref<4x512xf32, #tpu.memory_space<vmem>>, vector<4x512xf32>
    %c0_1 = arith.constant 0 : index
    %c0_2 = arith.constant 0 : index
    %1 = vector.load %arg1[%c0_1, %c0_2] : memref<32x4xf32, #tpu.memory_space<vmem>>, vector<32x4xf32>
    %cst = arith.constant dense<0.000000e+00> : vector<32x512xf32>
    %2 = tpu.matmul %1, %0, %cst {dimension_numbers = #tpu.dot_dimension_numbers<[1], [0], [0], [1], [0, 0, 1, 1], [], []>} : vector<32x4xf32>, vector<4x512xf32>, vector<32x512xf32> -> vector<32x512xf32>
    %cst_3 = arith.constant dense<0.000000e+00> : vector<32xf32>
    %3 = vector.multi_reduction <add>, %2, %cst_3 [1] : vector<32x512xf32> to vector<32xf32>
    %4 = vector.shape_cast %3 : vector<32xf32> to vector<32x1xf32>
    %5 = arith.mulf %2, %2 : vector<32x512xf32>
    %cst_4 = arith.constant dense<0.000000e+00> : vector<32xf32>
    %6 = vector.multi_reduction <add>, %5, %cst_4 [1] : vector<32x512xf32> to vector<32xf32>
    %7 = vector.shape_cast %6 : vector<32xf32> to vector<32x1xf32>
    %cst_5 = arith.constant 0.001953125 : f32
    %8 = vector.broadcast %cst_5 : f32 to vector<32x1xf32>
    %9 = arith.mulf %4, %8 : vector<32x1xf32>
    %cst_6 = arith.constant 0.001953125 : f32
    %10 = vector.broadcast %cst_6 : f32 to vector<32x1xf32>
    %11 = arith.mulf %7, %10 : vector<32x1xf32>
    %12 = arith.mulf %9, %9 : vector<32x1xf32>
    %13 = arith.subf %11, %12 : vector<32x1xf32>
    %cst_7 = arith.constant 0.000000e+00 : f32
    %14 = vector.broadcast %cst_7 : f32 to vector<32x1xf32>
    %15 = arith.maximumf %13, %14 : vector<32x1xf32>
    %c0_8 = arith.constant 0 : index
    %c0_9 = arith.constant 0 : index
    %16 = vector.load %arg2[%c0_8, %c0_9] : memref<32x1xf32, #tpu.memory_space<vmem>>, vector<32x1xf32>
    %cst_10 = arith.constant 9.99999974E-6 : f32
    %17 = vector.broadcast %cst_10 : f32 to vector<32x1xf32>
    %18 = arith.addf %15, %17 : vector<32x1xf32>
    %19 = math.rsqrt %18 : vector<32x1xf32>
    %20 = arith.mulf %16, %19 : vector<32x1xf32>
    %c0_11 = arith.constant 0 : index
    %c0_12 = arith.constant 0 : index
    %21 = vector.load %arg3[%c0_11, %c0_12] : memref<32x1xf32, #tpu.memory_space<vmem>>, vector<32x1xf32>
    %22 = arith.mulf %9, %20 : vector<32x1xf32>
    %23 = arith.subf %21, %22 : vector<32x1xf32>
    %24 = vector.broadcast %20 : vector<32x1xf32> to vector<32x512xf32>
    %25 = arith.mulf %2, %24 : vector<32x512xf32>
    %26 = vector.broadcast %23 : vector<32x1xf32> to vector<32x512xf32>
    %27 = arith.addf %25, %26 : vector<32x512xf32>
    %cst_13 = arith.constant 0.000000e+00 : f32
    %28 = vector.broadcast %cst_13 : f32 to vector<32x512xf32>
    %29 = arith.maximumf %27, %28 : vector<32x512xf32>
    %c0_14 = arith.constant 0 : index
    %c0_15 = arith.constant 0 : index
    %30 = vector.load %arg4[%c0_14, %c0_15] : memref<64x32xf32, #tpu.memory_space<vmem>>, vector<64x32xf32>
    %cst_16 = arith.constant dense<0.000000e+00> : vector<64x512xf32>
    %31 = tpu.matmul %30, %29, %cst_16 {dimension_numbers = #tpu.dot_dimension_numbers<[1], [0], [0], [1], [0, 0, 1, 1], [], []>} : vector<64x32xf32>, vector<32x512xf32>, vector<64x512xf32> -> vector<64x512xf32>
    %cst_17 = arith.constant dense<0.000000e+00> : vector<64xf32>
    %32 = vector.multi_reduction <add>, %31, %cst_17 [1] : vector<64x512xf32> to vector<64xf32>
    %33 = vector.shape_cast %32 : vector<64xf32> to vector<64x1xf32>
    %34 = arith.mulf %31, %31 : vector<64x512xf32>
    %cst_18 = arith.constant dense<0.000000e+00> : vector<64xf32>
    %35 = vector.multi_reduction <add>, %34, %cst_18 [1] : vector<64x512xf32> to vector<64xf32>
    %36 = vector.shape_cast %35 : vector<64xf32> to vector<64x1xf32>
    %cst_19 = arith.constant 0.001953125 : f32
    %37 = vector.broadcast %cst_19 : f32 to vector<64x1xf32>
    %38 = arith.mulf %33, %37 : vector<64x1xf32>
    %cst_20 = arith.constant 0.001953125 : f32
    %39 = vector.broadcast %cst_20 : f32 to vector<64x1xf32>
    %40 = arith.mulf %36, %39 : vector<64x1xf32>
    %41 = arith.mulf %38, %38 : vector<64x1xf32>
    %42 = arith.subf %40, %41 : vector<64x1xf32>
    %cst_21 = arith.constant 0.000000e+00 : f32
    %43 = vector.broadcast %cst_21 : f32 to vector<64x1xf32>
    %44 = arith.maximumf %42, %43 : vector<64x1xf32>
    %c0_22 = arith.constant 0 : index
    %c0_23 = arith.constant 0 : index
    %45 = vector.load %arg5[%c0_22, %c0_23] : memref<64x1xf32, #tpu.memory_space<vmem>>, vector<64x1xf32>
    %cst_24 = arith.constant 9.99999974E-6 : f32
    %46 = vector.broadcast %cst_24 : f32 to vector<64x1xf32>
    %47 = arith.addf %44, %46 : vector<64x1xf32>
    %48 = math.rsqrt %47 : vector<64x1xf32>
    %49 = arith.mulf %45, %48 : vector<64x1xf32>
    %c0_25 = arith.constant 0 : index
    %c0_26 = arith.constant 0 : index
    %50 = vector.load %arg6[%c0_25, %c0_26] : memref<64x1xf32, #tpu.memory_space<vmem>>, vector<64x1xf32>
    %51 = arith.mulf %38, %49 : vector<64x1xf32>
    %52 = arith.subf %50, %51 : vector<64x1xf32>
    %53 = vector.extract_strided_slice %31 {offsets = [0, 0], sizes = [64, 256], strides = [1, 1]} : vector<64x512xf32> to vector<64x256xf32>
    %cst_27 = arith.constant dense<0xFF800000> : vector<64xf32>
    %54 = vector.multi_reduction <maximumf>, %53, %cst_27 [1] : vector<64x256xf32> to vector<64xf32>
    %55 = vector.shape_cast %54 : vector<64xf32> to vector<64x1xf32>
    %cst_28 = arith.constant dense<0x7F800000> : vector<64xf32>
    %56 = vector.multi_reduction <minimumf>, %53, %cst_28 [1] : vector<64x256xf32> to vector<64xf32>
    %57 = vector.shape_cast %56 : vector<64xf32> to vector<64x1xf32>
    %cst_29 = arith.constant 0.000000e+00 : f32
    %58 = vector.broadcast %cst_29 : f32 to vector<64x1xf32>
    %59 = arith.cmpf oge, %49, %58 : vector<64x1xf32>
    %60 = arith.mulf %49, %55 : vector<64x1xf32>
    %61 = arith.mulf %49, %57 : vector<64x1xf32>
    %62 = arith.select %59, %60, %61 : vector<64x1xi1>, vector<64x1xf32>
    %63 = arith.addf %62, %52 : vector<64x1xf32>
    %cst_30 = arith.constant 0.000000e+00 : f32
    %64 = vector.broadcast %cst_30 : f32 to vector<64x1xf32>
    %65 = arith.maximumf %63, %64 : vector<64x1xf32>
    %c0_31 = arith.constant 0 : index
    %c0_32 = arith.constant 0 : index
    %66 = vector.load %arg7[%c0_31, %c0_32] : memref<64x2xf32, #tpu.memory_space<vmem>>, vector<64x1xf32>
    tpu.vector_store %arg7[%c0_31, %c0_32], %65 {strides = array<i32>} : memref<64x2xf32, #tpu.memory_space<vmem>>, vector<64x1xf32>,
    %67 = vector.extract_strided_slice %31 {offsets = [0, 256], sizes = [64, 256], strides = [1, 1]} : vector<64x512xf32> to vector<64x256xf32>
    %cst_33 = arith.constant dense<0xFF800000> : vector<64xf32>
    %68 = vector.multi_reduction <maximumf>, %67, %cst_33 [1] : vector<64x256xf32> to vector<64xf32>
    %69 = vector.shape_cast %68 : vector<64xf32> to vector<64x1xf32>
    %cst_34 = arith.constant dense<0x7F800000> : vector<64xf32>
    %70 = vector.multi_reduction <minimumf>, %67, %cst_34 [1] : vector<64x256xf32> to vector<64xf32>
    %71 = vector.shape_cast %70 : vector<64xf32> to vector<64x1xf32>
    %cst_35 = arith.constant 0.000000e+00 : f32
    %72 = vector.broadcast %cst_35 : f32 to vector<64x1xf32>
    %73 = arith.cmpf oge, %49, %72 : vector<64x1xf32>
    %74 = arith.mulf %49, %69 : vector<64x1xf32>
    %75 = arith.mulf %49, %71 : vector<64x1xf32>
    %76 = arith.select %73, %74, %75 : vector<64x1xi1>, vector<64x1xf32>
    %77 = arith.addf %76, %52 : vector<64x1xf32>
    %cst_36 = arith.constant 0.000000e+00 : f32
    %78 = vector.broadcast %cst_36 : f32 to vector<64x1xf32>
    %79 = arith.maximumf %77, %78 : vector<64x1xf32>
    %c0_37 = arith.constant 0 : index
    %c1 = arith.constant 1 : index
    %80 = vector.load %arg7[%c0_37, %c1] : memref<64x2xf32, #tpu.memory_space<vmem>>, vector<64x1xf32>
    tpu.vector_store %arg7[%c0_37, %c1], %79 {strides = array<i32>} : memref<64x2xf32, #tpu.memory_space<vmem>>, vector<64x1xf32>,
    return
  }
}

</mosaic_0001>

<llo_original>
// kernel: tpu_custom_call.1
$region0: #{tpu_custom_call.1}
  #allocation0 [shape = 'u32[]', space=smem, size = 0x4, offset = 0x4, fixed_abs, tag = 'smem constant byte address 0x4 - core index']
  #allocation1 [shape = 'u32[144,128]{1,0:T(1,128)}', space=vmem, size = 0x12000, scoped, tag = 'internal scratch']
  %s0 = inlined_call_operand.vmem [shape: f32[4,512], index: 0, kind: input, shape index: {}]
  %s1 = inlined_call_operand.vmem [shape: f32[32,4], index: 1, kind: input, shape index: {}]
  %s2 = inlined_call_operand.vmem [shape: f32[32,1], index: 2, kind: input, shape index: {}]
  %s3 = inlined_call_operand.vmem [shape: f32[32,1], index: 3, kind: input, shape index: {}]
  %s4 = inlined_call_operand.vmem [shape: f32[64,32], index: 4, kind: input, shape index: {}]
  %s5 = inlined_call_operand.vmem [shape: f32[64,1], index: 5, kind: input, shape index: {}]
  %s6 = inlined_call_operand.vmem [shape: f32[64,1], index: 6, kind: input, shape index: {}]
  %s7 = inlined_call_operand.vmem [shape: f32[64,2], index: 7, kind: output, shape index: {}]
  %s8 = sld [smem:[#allocation0]]
  $region38: #{tpu_custom_call.1} parent=0
    _
  %s10 = ssub.s32 1, %s8
  %s11 = scalar_select 0, %s10, %s8
  // Predicated region
  $region2: #{tpu_custom_call.1} parent=0 // pred_check
    _
  $region3: #{tpu_custom_call.1} parent=0 // pred_check_branch
    %13 = sbr.rel (0) target = $region5
  $region4: #{tpu_custom_call.1} parent=0 // pred_region
    _
  $region5: #{tpu_custom_call.1} parent=0 // pred_fallthru
    _
  // Predicated region
  $region6: #{tpu_custom_call.1} parent=0 // pred_check
    _
  $region7: #{tpu_custom_call.1} parent=0 // pred_check_branch
    %15 = sbr.rel (0) target = $region9
  $region8: #{tpu_custom_call.1} parent=0 // pred_region
    _
  $region9: #{tpu_custom_call.1} parent=0 // pred_fallthru
    _
  // Predicated region
  $region10: #{tpu_custom_call.1} parent=0 // pred_check
    _
  $region11: #{tpu_custom_call.1} parent=0 // pred_check_branch
    %17 = sbr.rel (0) target = $region13
  $region12: #{tpu_custom_call.1} parent=0 // pred_region
    _
  $region13: #{tpu_custom_call.1} parent=0 // pred_fallthru
    _
  // Predicated region
  $region14: #{tpu_custom_call.1} parent=0 // pred_check
    _
  $region15: #{tpu_custom_call.1} parent=0 // pred_check_branch
    %19 = sbr.rel (0) target = $region17
  $region16: #{tpu_custom_call.1} parent=0 // pred_region
    _
  $region17: #{tpu_custom_call.1} parent=0 // pred_fallthru
    _
  // Predicated region
  $region18: #{tpu_custom_call.1} parent=0 // pred_check
    _
  $region19: #{tpu_custom_call.1} parent=0 // pred_check_branch
    %21 = sbr.rel (0) target = $region21
  $region20: #{tpu_custom_call.1} parent=0 // pred_region
    _
  $region21: #{tpu_custom_call.1} parent=0 // pred_fallthru
    _
  // Predicated region
  $region22: #{tpu_custom_call.1} parent=0 // pred_check
    _
  $region23: #{tpu_custom_call.1} parent=0 // pred_check_branch
    %23 = sbr.rel (0) target = $region25
  $region24: #{tpu_custom_call.1} parent=0 // pred_region
    _
  $region25: #{tpu_custom_call.1} parent=0 // pred_fallthru
    _
  // Predicated region
  $region26: #{tpu_custom_call.1} parent=0 // pred_check
    _
  $region27: #{tpu_custom_call.1} parent=0 // pred_check_branch
    %25 = sbr.rel (0) target = $region29
  $region28: #{tpu_custom_call.1} parent=0 // pred_region
    _
  $region29: #{tpu_custom_call.1} parent=0 // pred_fallthru
    _
  %v26 = vld [vmem:[%s0] sm:$0xff]
  %v27 = vld [vmem:[%s0 + $0x8] sm:$0xff]
  %v28 = vld [vmem:[%s1] sm:$0xff]
  %v29 = vld [vmem:[%s1 + $0x8] sm:$0xff]
  %v30 = vld [vmem:[%s1 + $0x10] sm:$0xff]
  %v31 = vld [vmem:[%s1 + $0x18] sm:$0xff]
  %v34 = vcombine.high %v26, %v26
  %v35 = vcombine.high %v27, %v27
  %vm36 = vcmask 31744
  %v38 = vsel %vm36, %v28, 0
  %v41 = vsel %vm36, %v29, 0
  %v44 = vsel %vm36, %v30, 0
  %v47 = vsel %vm36, %v31, 0
  %vm49 = vcmask 1043456
  %v50 = vsel %vm49, %v26, 0
  %v52 = vsel %vm49, %v34, 0
  %v54 = vsel %vm49, %v27, 0
  %v56 = vsel %vm49, %v35, 0
  %58 = vmatprep.subr.mxu0 0.0
  %59 = vmatpush1.msra.mxu0 0.0
  %60 = vmatprep.subr.mxu0 0.0
  %61 = vmatpush1.msra.mxu0 0.0
  %62 = vmatprep.subr.mxu0 0.0
  %63 = vmatpush1.msra.mxu0 0.0
  %64 = vmatprep.subr.mxu0 0.0
  %65 = vmatpush1.msra.mxu0 0.0
  %66 = vmatprep.subr.mxu0 0.0
  %67 = vmatpush1.msra.mxu0 0.0
  %68 = vmatprep.subr.mxu0 0.0
  %69 = vmatpush1.msra.mxu0 0.0
  %70 = vmatprep.subr.mxu0 0.0
  %71 = vmatpush1.msra.mxu0 0.0
  %72 = vmatprep.subr.mxu0 0.0
  %73 = vmatpush1.msra.mxu0 0.0
  %74 = vmatprep.subr.mxu0 0.0
  %75 = vmatpush1.msra.mxu0 0.0
  %76 = vmatprep.subr.mxu0 0.0
  %77 = vmatpush1.msra.mxu0 0.0
  %78 = vmatprep.subr.mxu0 0.0
  %79 = vmatpush1.msra.mxu0 0.0
  %80 = vmatprep.subr.mxu0 0.0
  %81 = vmatpush1.msra.mxu0 0.0
  %82 = vmatprep.subr.mxu0 0.0
  %83 = vmatpush1.msra.mxu0 0.0
  %84 = vmatprep.subr.mxu0 0.0
  %85 = vmatpush1.msra.mxu0 0.0
  %86 = vmatprep.subr.mxu0 0.0
  %87 = vmatpush1.msra.mxu0 0.0
  %88 = vmatprep.subr.mxu0 %v52
  %89 = vmatpush1.msra.mxu0 %v50
  %90 = vmatprep.subr.mxu0 0.0
  %91 = vmatpush2.msra.mxu0 0.0
  %92 = vmatprep.subr.mxu0 0.0
  %93 = vmatpush2.msra.mxu0 0.0
  %94 = vmatprep.subr.mxu0 0.0
  %95 = vmatpush2.msra.mxu0 0.0
  %96 = vmatprep.subr.mxu0 0.0
  %97 = vmatpush2.msra.mxu0 0.0
  %98 = vmatprep.subr.mxu0 0.0
  %99 = vmatpush2.msra.mxu0 0.0
  %100 = vmatprep.subr.mxu0 0.0
  %101 = vmatpush2.msra.mxu0 0.0
  %102 = vmatprep.subr.mxu0 0.0
  %103 = vmatpush2.msra.mxu0 0.0
  %104 = vmatprep.subr.mxu0 0.0
  %105 = vmatpush2.msra.mxu0 0.0
  %106 = vmatprep.subr.mxu0 0.0
  %107 = vmatpush2.msra.mxu0 0.0
  %108 = vmatprep.subr.mxu0 0.0
  %109 = vmatpush2.msra.mxu0 0.0
  %110 = vmatprep.subr.mxu0 0.0
  %111 = vmatpush2.msra.mxu0 0.0
  %112 = vmatprep.subr.mxu0 0.0
  %113 = vmatpush2.msra.mxu0 0.0
  %114 = vmatprep.subr.mxu0 0.0
  %115 = vmatpush2.msra.mxu0 0.0
  %116 = vmatprep.subr.mxu0 0.0
  %117 = vmatpush2.msra.mxu0 0.0
  %118 = vmatprep.subr.mxu0 0.0
  %119 = vmatpush2.msra.mxu0 0.0
  %120 = vmatprep.subr.mxu0 0.0
  %121 = vmatpush2.msra.mxu0 0.0
  %122 = vmatprep.mubr.f32.mxu0 0.0
  %123 = vmatmul.mubr.f32.gmra.mxu0 %v38
  %v124 = vpop.f32.mrf.mxu0
  %v125 = vadd.f32 0.0, %v124
  %v126 = vpop.f32.mrf.mxu0
  %v127 = vadd.f32 0.0, %v126
  %128 = vmatprep.mubr.f32.mxu0 0.0
  %129 = vmatmul.mubr.f32.gmra.mxu0 %v41
  %v130 = vpop.f32.mrf.mxu0
  %v131 = vadd.f32 0.0, %v130
  %v132 = vpop.f32.mrf.mxu0
  %v133 = vadd.f32 0.0, %v132
  %134 = vmatprep.mubr.f32.mxu0 0.0
  %135 = vmatmul.mubr.f32.gmra.mxu0 %v44
  %v136 = vpop.f32.mrf.mxu0
  %v137 = vadd.f32 0.0, %v136
  %v138 = vpop.f32.mrf.mxu0
  %v139 = vadd.f32 0.0, %v138
  %140 = vmatprep.mubr.f32.mxu0 0.0
  %141 = vmatmul.mubr.f32.gmra.mxu0 %v47
  %v142 = vpop.f32.mrf.mxu0
  %v143 = vadd.f32 0.0, %v142
  %v144 = vpop.f32.mrf.mxu0
  %v145 = vadd.f32 0.0, %v144
  %146 = vdwg.mxu0
  %147 = vmatprep.subr.mxu0 0.0
  %148 = vmatpush1.msra.mxu0 0.0
  %149 = vmatprep.subr.mxu0 0.0
  %150 = vmatpush1.msra.mxu0 0.0
  %151 = vmatprep.subr.mxu0 0.0
  %152 = vmatpush1.msra.mxu0 0.0
  %153 = vmatprep.subr.mxu0 0.0
  %154 = vmatpush1.msra.mxu0 0.0
  %155 = vmatprep.subr.mxu0 0.0
  %156 = vmatpush1.msra.mxu0 0.0
  %157 = vmatprep.subr.mxu0 0.0
  %158 = vmatpush1.msra.mxu0 0.0
  %159 = vmatprep.subr.mxu0 0.0
  %160 = vmatpush1.msra.mxu0 0.0
  %161 = vmatprep.subr.mxu0 0.0
  %162 = vmatpush1.msra.mxu0 0.0
  %163 = vmatprep.subr.mxu0 0.0
  %164 = vmatpush1.msra.mxu0 0.0
  %165 = vmatprep.subr.mxu0 0.0
  %166 = vmatpush1.msra.mxu0 0.0
  %167 = vmatprep.subr.mxu0 0.0
  %168 = vmatpush1.msra.mxu0 0.0
  %169 = vmatprep.subr.mxu0 0.0
  %170 = vmatpush1.msra.mxu0 0.0
  %171 = vmatprep.subr.mxu0 0.0
  %172 = vmatpush1.msra.mxu0 0.0
  %173 = vmatprep.subr.mxu0 0.0
  %174 = vmatpush1.msra.mxu0 0.0
  %175 = vmatprep.subr.mxu0 0.0
  %176 = vmatpush1.msra.mxu0 0.0
  %177 = vmatprep.subr.mxu0 %v56
  %178 = vmatpush1.msra.mxu0 %v54
  %179 = vmatprep.subr.mxu0 0.0
  %180 = vmatpush2.msra.mxu0 0.0
  %181 = vmatprep.subr.mxu0 0.0
  %182 = vmatpush2.msra.mxu0 0.0
  %183 = vmatprep.subr.mxu0 0.0
  %184 = vmatpush2.msra.mxu0 0.0
  %185 = vmatprep.subr.mxu0 0.0
  %186 = vmatpush2.msra.mxu0 0.0
  %187 = vmatprep.subr.mxu0 0.0
  %188 = vmatpush2.msra.mxu0 0.0
  %189 = vmatprep.subr.mxu0 0.0
  %190 = vmatpush2.msra.mxu0 0.0
  %191 = vmatprep.subr.mxu0 0.0
  %192 = vmatpush2.msra.mxu0 0.0
  %193 = vmatprep.subr.mxu0 0.0
  %194 = vmatpush2.msra.mxu0 0.0
  %195 = vmatprep.subr.mxu0 0.0
  %196 = vmatpush2.msra.mxu0 0.0
  %197 = vmatprep.subr.mxu0 0.0
  %198 = vmatpush2.msra.mxu0 0.0
  %199 = vmatprep.subr.mxu0 0.0
  %200 = vmatpush2.msra.mxu0 0.0
  %201 = vmatprep.subr.mxu0 0.0
  %202 = vmatpush2.msra.mxu0 0.0
  %203 = vmatprep.subr.mxu0 0.0
  %204 = vmatpush2.msra.mxu0 0.0
  %205 = vmatprep.subr.mxu0 0.0
  %206 = vmatpush2.msra.mxu0 0.0
  %207 = vmatprep.subr.mxu0 0.0
  %208 = vmatpush2.msra.mxu0 0.0
  %209 = vmatprep.subr.mxu0 0.0
  %210 = vmatpush2.msra.mxu0 0.0
  %211 = vmatprep.mubr.f32.mxu0 0.0
  %212 = vmatmul.mubr.f32.gmra.mxu0 %v38
  %v213 = vpop.f32.mrf.mxu0
  %v214 = vadd.f32 0.0, %v213
  %v215 = vpop.f32.mrf.mxu0
  %v216 = vadd.f32 0.0, %v215
  %217 = vmatprep.mubr.f32.mxu0 0.0
  %218 = vmatmul.mubr.f32.gmra.mxu0 %v41
  %v219 = vpop.f32.mrf.mxu0
  %v220 = vadd.f32 0.0, %v219
  %v221 = vpop.f32.mrf.mxu0
  %v222 = vadd.f32 0.0, %v221
  %223 = vmatprep.mubr.f32.mxu0 0.0
  %224 = vmatmul.mubr.f32.gmra.mxu0 %v44
  %v225 = vpop.f32.mrf.mxu0
  %v226 = vadd.f32 0.0, %v225
  %v227 = vpop.f32.mrf.mxu0
  %v228 = vadd.f32 0.0, %v227
  %229 = vmatprep.mubr.f32.mxu0 0.0
  %230 = vmatmul.mubr.f32.gmra.mxu0 %v47
  %v231 = vpop.f32.mrf.mxu0
  %v232 = vadd.f32 0.0, %v231
  %v233 = vpop.f32.mrf.mxu0
  %v234 = vadd.f32 0.0, %v233
  %235 = vdwg.mxu0
  %v236 = vadd.f32 %v125, %v127
  %v237 = vadd.f32 %v236, %v214
  %v238 = vadd.f32 %v237, %v216
  %239 = vadd.xlane.f32.xlu0 %v238
  %v240 = vpop.xlane.xlu0 %239
  %v241 = vadd.f32 %v131, %v133
  %v242 = vadd.f32 %v241, %v220
  %v243 = vadd.f32 %v242, %v222
  %244 = vadd.xlane.f32.xlu0 %v243
  %v245 = vpop.xlane.xlu0 %244
  %v246 = vadd.f32 %v137, %v139
  %v247 = vadd.f32 %v246, %v226
  %v248 = vadd.f32 %v247, %v228
  %249 = vadd.xlane.f32.xlu0 %v248
  %v250 = vpop.xlane.xlu0 %249
  %v251 = vadd.f32 %v143, %v145
  %v252 = vadd.f32 %v251, %v232
  %v253 = vadd.f32 %v252, %v234
  %254 = vadd.xlane.f32.xlu0 %v253
  %v255 = vpop.xlane.xlu0 %254
  %v256 = vmul.f32 %v125, %v125
  %v257 = vmul.f32 %v127, %v127
  %v258 = vmul.f32 %v214, %v214
  %v259 = vmul.f32 %v216, %v216
  %v260 = vmul.f32 %v131, %v131
  %v261 = vmul.f32 %v133, %v133
  %v262 = vmul.f32 %v220, %v220
  %v263 = vmul.f32 %v222, %v222
  %v264 = vmul.f32 %v137, %v137
  %v265 = vmul.f32 %v139, %v139
  %v266 = vmul.f32 %v226, %v226
  %v267 = vmul.f32 %v228, %v228
  %v268 = vmul.f32 %v143, %v143
  %v269 = vmul.f32 %v145, %v145
  %v270 = vmul.f32 %v232, %v232
  %v271 = vmul.f32 %v234, %v234
  %v272 = vadd.f32 %v256, %v257
  %v273 = vadd.f32 %v272, %v258
  %v274 = vadd.f32 %v273, %v259
  %275 = vadd.xlane.f32.xlu0 %v274
  %v276 = vpop.xlane.xlu0 %275
  %v277 = vadd.f32 %v260, %v261
  %v278 = vadd.f32 %v277, %v262
  %v279 = vadd.f32 %v278, %v263
  %280 = vadd.xlane.f32.xlu0 %v279
  %v281 = vpop.xlane.xlu0 %280
  %v282 = vadd.f32 %v264, %v265
  %v283 = vadd.f32 %v282, %v266
  %v284 = vadd.f32 %v283, %v267
  %285 = vadd.xlane.f32.xlu0 %v284
  %v286 = vpop.xlane.xlu0 %285
  %v287 = vadd.f32 %v268, %v269
  %v288 = vadd.f32 %v287, %v270
  %v289 = vadd.f32 %v288, %v271
  %290 = vadd.xlane.f32.xlu0 %v289
  %v291 = vpop.xlane.xlu0 %290
  %v292 = vmul.f32 %v240, 0.001953125
  %v293 = vmul.f32 %v245, 0.001953125
  %v294 = vmul.f32 %v250, 0.001953125
  %v295 = vmul.f32 %v255, 0.001953125
  %v296 = vmul.f32 %v276, 0.001953125
  %v297 = vmul.f32 %v281, 0.001953125
  %v298 = vmul.f32 %v286, 0.001953125
  %v299 = vmul.f32 %v291, 0.001953125
  %v300 = vmul.f32 %v292, %v292
  %v301 = vmul.f32 %v293, %v293
  %v302 = vmul.f32 %v294, %v294
  %v303 = vmul.f32 %v295, %v295
  %v304 = vsub.f32 %v296, %v300
  %v305 = vsub.f32 %v297, %v301
  %v306 = vsub.f32 %v298, %v302
  %v307 = vsub.f32 %v299, %v303
  %v308 = vmax.f32 %v304, 0.0
  %v309 = vmax.f32 %v305, 0.0
  %v310 = vmax.f32 %v306, 0.0
  %v311 = vmax.f32 %v307, 0.0
  %v312 = vld [vmem:[%s2] sm:$0xff]
  %v313 = vld [vmem:[%s2 + $0x8] sm:$0xff]
  %v314 = vld [vmem:[%s2 + $0x10] sm:$0xff]
  %v315 = vld [vmem:[%s2 + $0x18] sm:$0xff]
  %v316 = vadd.f32 %v308, 1e-05
  %v317 = vadd.f32 %v309, 1e-05
  %v318 = vadd.f32 %v310, 1e-05
  %v319 = vadd.f32 %v311, 1e-05
  %v320 = vrsqrt.pop %v316
  %v321 = vrsqrt.pop %v317
  %v322 = vrsqrt.pop %v318
  %v323 = vrsqrt.pop %v319
  %v324 = vmul.f32 %v312, %v320
  %v325 = vmul.f32 %v313, %v321
  %v326 = vmul.f32 %v314, %v322
  %v327 = vmul.f32 %v315, %v323
  %v328 = vld [vmem:[%s3] sm:$0xff]
  %v329 = vld [vmem:[%s3 + $0x8] sm:$0xff]
  %v330 = vld [vmem:[%s3 + $0x10] sm:$0xff]
  %v331 = vld [vmem:[%s3 + $0x18] sm:$0xff]
  %v332 = vmul.f32 %v292, %v324
  %v333 = vmul.f32 %v293, %v325
  %v334 = vmul.f32 %v294, %v326
  %v335 = vmul.f32 %v295, %v327
  %v336 = vsub.f32 %v328, %v332
  %v337 = vsub.f32 %v329, %v333
  %v338 = vsub.f32 %v330, %v334
  %v339 = vsub.f32 %v331, %v335
  %341 = vset.pattern.permute.xlu0 0
  %342 = vperm.xlu0 %341, %v324
  %v343 = vpop.permute.xlu0 %342
  %346 = vset.pattern.permute.xlu0 0
  %347 = vperm.xlu0 %346, %v325
  %v348 = vpop.permute.xlu0 %347
  %351 = vset.pattern.permute.xlu0 0
  %352 = vperm.xlu0 %351, %v326
  %v353 = vpop.permute.xlu0 %352
  %356 = vset.pattern.permute.xlu0 0
  %357 = vperm.xlu0 %356, %v327
  %v358 = vpop.permute.xlu0 %357
  %v360 = vmul.f32 %v125, %v343
  %v361 = vmul.f32 %v127, %v343
  %v362 = vmul.f32 %v214, %v343
  %v363 = vmul.f32 %v216, %v343
  %v364 = vmul.f32 %v131, %v348
  %v365 = vmul.f32 %v133, %v348
  %v366 = vmul.f32 %v220, %v348
  %v367 = vmul.f32 %v222, %v348
  %v368 = vmul.f32 %v137, %v353
  %v369 = vmul.f32 %v139, %v353
  %v370 = vmul.f32 %v226, %v353
  %v371 = vmul.f32 %v228, %v353
  %v372 = vmul.f32 %v143, %v358
  %v373 = vmul.f32 %v145, %v358
  %v374 = vmul.f32 %v232, %v358
  %v375 = vmul.f32 %v234, %v358
  %377 = vset.pattern.permute.xlu0 0
  %378 = vperm.xlu0 %377, %v336
  %v379 = vpop.permute.xlu0 %378
  %382 = vset.pattern.permute.xlu0 0
  %383 = vperm.xlu0 %382, %v337
  %v384 = vpop.permute.xlu0 %383
  %387 = vset.pattern.permute.xlu0 0
  %388 = vperm.xlu0 %387, %v338
  %v389 = vpop.permute.xlu0 %388
  %392 = vset.pattern.permute.xlu0 0
  %393 = vperm.xlu0 %392, %v339
  %v394 = vpop.permute.xlu0 %393
  %v396 = vadd.f32 %v360, %v379
  %v397 = vadd.f32 %v361, %v379
  %v398 = vadd.f32 %v362, %v379
  %v399 = vadd.f32 %v363, %v379
  %v400 = vadd.f32 %v364, %v384
  %v401 = vadd.f32 %v365, %v384
  %v402 = vadd.f32 %v366, %v384
  %v403 = vadd.f32 %v367, %v384
  %v404 = vadd.f32 %v368, %v389
  %v405 = vadd.f32 %v369, %v389
  %v406 = vadd.f32 %v370, %v389
  %v407 = vadd.f32 %v371, %v389
  %v408 = vadd.f32 %v372, %v394
  %v409 = vadd.f32 %v373, %v394
  %v410 = vadd.f32 %v374, %v394
  %v411 = vadd.f32 %v375, %v394
  %v412 = vmax.f32 %v396, 0.0
  %v413 = vmax.f32 %v397, 0.0
  %v414 = vmax.f32 %v398, 0.0
  %v415 = vmax.f32 %v399, 0.0
  %v416 = vmax.f32 %v400, 0.0
  %v417 = vmax.f32 %v401, 0.0
  %v418 = vmax.f32 %v402, 0.0
  %v419 = vmax.f32 %v403, 0.0
  %v420 = vmax.f32 %v404, 0.0
  %v421 = vmax.f32 %v405, 0.0
  %v422 = vmax.f32 %v406, 0.0
  %v423 = vmax.f32 %v407, 0.0
  %v424 = vmax.f32 %v408, 0.0
  %v425 = vmax.f32 %v409, 0.0
  %v426 = vmax.f32 %v410, 0.0
  %v427 = vmax.f32 %v411, 0.0
  %v428 = vld [vmem:[%s4] sm:$0xff]
  %v429 = vld [vmem:[%s4 + $0x8] sm:$0xff]
  %v430 = vld [vmem:[%s4 + $0x10] sm:$0xff]
  %v431 = vld [vmem:[%s4 + $0x18] sm:$0xff]
  %v432 = vld [vmem:[%s4 + $0x20] sm:$0xff]
  %v433 = vld [vmem:[%s4 + $0x28] sm:$0xff]
  %v434 = vld [vmem:[%s4 + $0x30] sm:$0xff]
  %v435 = vld [vmem:[%s4 + $0x38] sm:$0xff]
  %vm436 = vcmask 261120
  %v438 = vsel %vm436, %v428, 0
  %v441 = vsel %vm436, %v429, 0
  %v444 = vsel %vm436, %v430, 0
  %v447 = vsel %vm436, %v431, 0
  %v450 = vsel %vm436, %v432, 0
  %v453 = vsel %vm436, %v433, 0
  %v456 = vsel %vm436, %v434, 0
  %v459 = vsel %vm436, %v435, 0
  %461 = vmatprep.subr.mxu0 0.0
  %462 = vmatpush1.msra.mxu0 0.0
  %463 = vmatprep.subr.mxu0 0.0
  %464 = vmatpush1.msra.mxu0 0.0
  %465 = vmatprep.subr.mxu0 0.0
  %466 = vmatpush1.msra.mxu0 0.0
  %467 = vmatprep.subr.mxu0 0.0
  %468 = vmatpush1.msra.mxu0 0.0
  %469 = vmatprep.subr.mxu0 0.0
  %470 = vmatpush1.msra.mxu0 0.0
  %471 = vmatprep.subr.mxu0 0.0
  %472 = vmatpush1.msra.mxu0 0.0
  %473 = vmatprep.subr.mxu0 0.0
  %474 = vmatpush1.msra.mxu0 0.0
  %475 = vmatprep.subr.mxu0 0.0
  %476 = vmatpush1.msra.mxu0 0.0
  %477 = vmatprep.subr.mxu0 0.0
  %478 = vmatpush1.msra.mxu0 0.0
  %479 = vmatprep.subr.mxu0 0.0
  %480 = vmatpush1.msra.mxu0 0.0
  %481 = vmatprep.subr.mxu0 0.0
  %482 = vmatpush1.msra.mxu0 0.0
  %483 = vmatprep.subr.mxu0 0.0
  %484 = vmatpush1.msra.mxu0 0.0
  %485 = vmatprep.subr.mxu0 %v425
  %486 = vmatpush1.msra.mxu0 %v424
  %487 = vmatprep.subr.mxu0 %v421
  %488 = vmatpush1.msra.mxu0 %v420
  %489 = vmatprep.subr.mxu0 %v417
  %490 = vmatpush1.msra.mxu0 %v416
  %491 = vmatprep.subr.mxu0 %v413
  %492 = vmatpush1.msra.mxu0 %v412
  %493 = vmatprep.subr.mxu0 0.0
  %494 = vmatpush2.msra.mxu0 0.0
  %495 = vmatprep.subr.mxu0 0.0
  %496 = vmatpush2.msra.mxu0 0.0
  %497 = vmatprep.subr.mxu0 0.0
  %498 = vmatpush2.msra.mxu0 0.0
  %499 = vmatprep.subr.mxu0 0.0
  %500 = vmatpush2.msra.mxu0 0.0
  %501 = vmatprep.subr.mxu0 0.0
  %502 = vmatpush2.msra.mxu0 0.0
  %503 = vmatprep.subr.mxu0 0.0
  %504 = vmatpush2.msra.mxu0 0.0
  %505 = vmatprep.subr.mxu0 0.0
  %506 = vmatpush2.msra.mxu0 0.0
  %507 = vmatprep.subr.mxu0 0.0
  %508 = vmatpush2.msra.mxu0 0.0
  %509 = vmatprep.subr.mxu0 0.0
  %510 = vmatpush2.msra.mxu0 0.0
  %511 = vmatprep.subr.mxu0 0.0
  %512 = vmatpush2.msra.mxu0 0.0
  %513 = vmatprep.subr.mxu0 0.0
  %514 = vmatpush2.msra.mxu0 0.0
  %515 = vmatprep.subr.mxu0 0.0
  %516 = vmatpush2.msra.mxu0 0.0
  %517 = vmatprep.subr.mxu0 0.0
  %518 = vmatpush2.msra.mxu0 0.0
  %519 = vmatprep.subr.mxu0 0.0
  %520 = vmatpush2.msra.mxu0 0.0
  %521 = vmatprep.subr.mxu0 0.0
  %522 = vmatpush2.msra.mxu0 0.0
  %523 = vmatprep.subr.mxu0 0.0
  %524 = vmatpush2.msra.mxu0 0.0
  %525 = vmatprep.mubr.f32.mxu0 0.0
  %526 = vmatmul.mubr.f32.gmra.mxu0 %v438
  %v527 = vpop.f32.mrf.mxu0
  %v528 = vadd.f32 0.0, %v527
  %v529 = vpop.f32.mrf.mxu0
  %v530 = vadd.f32 0.0, %v529
  %531 = vmatprep.mubr.f32.mxu0 0.0
  %532 = vmatmul.mubr.f32.gmra.mxu0 %v441
  %v533 = vpop.f32.mrf.mxu0
  %v534 = vadd.f32 0.0, %v533
  %v535 = vpop.f32.mrf.mxu0
  %v536 = vadd.f32 0.0, %v535
  %537 = vmatprep.mubr.f32.mxu0 0.0
  %538 = vmatmul.mubr.f32.gmra.mxu0 %v444
  %v539 = vpop.f32.mrf.mxu0
  %v540 = vadd.f32 0.0, %v539
  %v541 = vpop.f32.mrf.mxu0
  %v542 = vadd.f32 0.0, %v541
  %543 = vmatprep.mubr.f32.mxu0 0.0
  %544 = vmatmul.mubr.f32.gmra.mxu0 %v447
  %v545 = vpop.f32.mrf.mxu0
  %v546 = vadd.f32 0.0, %v545
  %v547 = vpop.f32.mrf.mxu0
  %v548 = vadd.f32 0.0, %v547
  %549 = vmatprep.mubr.f32.mxu0 0.0
  %550 = vmatmul.mubr.f32.gmra.mxu0 %v450
  %v551 = vpop.f32.mrf.mxu0
  %v552 = vadd.f32 0.0, %v551
  %v553 = vpop.f32.mrf.mxu0
  %v554 = vadd.f32 0.0, %v553
  %555 = vmatprep.mubr.f32.mxu0 0.0
  %556 = vmatmul.mubr.f32.gmra.mxu0 %v453
  %v557 = vpop.f32.mrf.mxu0
  %v558 = vadd.f32 0.0, %v557
  %v559 = vpop.f32.mrf.mxu0
  %v560 = vadd.f32 0.0, %v559
  %561 = vmatprep.mubr.f32.mxu0 0.0
  %562 = vmatmul.mubr.f32.gmra.mxu0 %v456
  %v563 = vpop.f32.mrf.mxu0
  %v564 = vadd.f32 0.0, %v563
  %v565 = vpop.f32.mrf.mxu0
  %v566 = vadd.f32 0.0, %v565
  %567 = vmatprep.mubr.f32.mxu0 0.0
  %568 = vmatmul.mubr.f32.gmra.mxu0 %v459
  %v569 = vpop.f32.mrf.mxu0
  %v570 = vadd.f32 0.0, %v569
  %v571 = vpop.f32.mrf.mxu0
  %v572 = vadd.f32 0.0, %v571
  %573 = vdwg.mxu0
  %574 = vmatprep.subr.mxu0 0.0
  %575 = vmatpush1.msra.mxu0 0.0
  %576 = vmatprep.subr.mxu0 0.0
  %577 = vmatpush1.msra.mxu0 0.0
  %578 = vmatprep.subr.mxu0 0.0
  %579 = vmatpush1.msra.mxu0 0.0
  %580 = vmatprep.subr.mxu0 0.0
  %581 = vmatpush1.msra.mxu0 0.0
  %582 = vmatprep.subr.mxu0 0.0
  %583 = vmatpush1.msra.mxu0 0.0
  %584 = vmatprep.subr.mxu0 0.0
  %585 = vmatpush1.msra.mxu0 0.0
  %586 = vmatprep.subr.mxu0 0.0
  %587 = vmatpush1.msra.mxu0 0.0
  %588 = vmatprep.subr.mxu0 0.0
  %589 = vmatpush1.msra.mxu0 0.0
  %590 = vmatprep.subr.mxu0 0.0
  %591 = vmatpush1.msra.mxu0 0.0
  %592 = vmatprep.subr.mxu0 0.0
  %593 = vmatpush1.msra.mxu0 0.0
  %594 = vmatprep.subr.mxu0 0.0
  %595 = vmatpush1.msra.mxu0 0.0
  %596 = vmatprep.subr.mxu0 0.0
  %597 = vmatpush1.msra.mxu0 0.0
  %598 = vmatprep.subr.mxu0 %v427
  %599 = vmatpush1.msra.mxu0 %v426
  %600 = vmatprep.subr.mxu0 %v423
  %601 = vmatpush1.msra.mxu0 %v422
  %602 = vmatprep.subr.mxu0 %v419
  %603 = vmatpush1.msra.mxu0 %v418
  %604 = vmatprep.subr.mxu0 %v415
  %605 = vmatpush1.msra.mxu0 %v414
  %606 = vmatprep.subr.mxu0 0.0
  %607 = vmatpush2.msra.mxu0 0.0
  %608 = vmatprep.subr.mxu0 0.0
  %609 = vmatpush2.msra.mxu0 0.0
  %610 = vmatprep.subr.mxu0 0.0
  %611 = vmatpush2.msra.mxu0 0.0
  %612 = vmatprep.subr.mxu0 0.0
  %613 = vmatpush2.msra.mxu0 0.0
  %614 = vmatprep.subr.mxu0 0.0
  %615 = vmatpush2.msra.mxu0 0.0
  %616 = vmatprep.subr.mxu0 0.0
  %617 = vmatpush2.msra.mxu0 0.0
  %618 = vmatprep.subr.mxu0 0.0
  %619 = vmatpush2.msra.mxu0 0.0
  %620 = vmatprep.subr.mxu0 0.0
  %621 = vmatpush2.msra.mxu0 0.0
  %622 = vmatprep.subr.mxu0 0.0
  %623 = vmatpush2.msra.mxu0 0.0
  %624 = vmatprep.subr.mxu0 0.0
  %625 = vmatpush2.msra.mxu0 0.0
  %626 = vmatprep.subr.mxu0 0.0
  %627 = vmatpush2.msra.mxu0 0.0
  %628 = vmatprep.subr.mxu0 0.0
  %629 = vmatpush2.msra.mxu0 0.0
  %630 = vmatprep.subr.mxu0 0.0
  %631 = vmatpush2.msra.mxu0 0.0
  %632 = vmatprep.subr.mxu0 0.0
  %633 = vmatpush2.msra.mxu0 0.0
  %634 = vmatprep.subr.mxu0 0.0
  %635 = vmatpush2.msra.mxu0 0.0
  %636 = vmatprep.subr.mxu0 0.0
  %637 = vmatpush2.msra.mxu0 0.0
  %638 = vmatprep.mubr.f32.mxu0 0.0
  %639 = vmatmul.mubr.f32.gmra.mxu0 %v438
  %v640 = vpop.f32.mrf.mxu0
  %v641 = vadd.f32 0.0, %v640
  %v642 = vpop.f32.mrf.mxu0
  %v643 = vadd.f32 0.0, %v642
  %644 = vmatprep.mubr.f32.mxu0 0.0
  %645 = vmatmul.mubr.f32.gmra.mxu0 %v441
  %v646 = vpop.f32.mrf.mxu0
  %v647 = vadd.f32 0.0, %v646
  %v648 = vpop.f32.mrf.mxu0
  %v649 = vadd.f32 0.0, %v648
  %650 = vmatprep.mubr.f32.mxu0 0.0
  %651 = vmatmul.mubr.f32.gmra.mxu0 %v444
  %v652 = vpop.f32.mrf.mxu0
  %v653 = vadd.f32 0.0, %v652
  %v654 = vpop.f32.mrf.mxu0
  %v655 = vadd.f32 0.0, %v654
  %656 = vmatprep.mubr.f32.mxu0 0.0
  %657 = vmatmul.mubr.f32.gmra.mxu0 %v447
  %v658 = vpop.f32.mrf.mxu0
  %v659 = vadd.f32 0.0, %v658
  %v660 = vpop.f32.mrf.mxu0
  %v661 = vadd.f32 0.0, %v660
  %662 = vmatprep.mubr.f32.mxu0 0.0
  %663 = vmatmul.mubr.f32.gmra.mxu0 %v450
  %v664 = vpop.f32.mrf.mxu0
  %v665 = vadd.f32 0.0, %v664
  %v666 = vpop.f32.mrf.mxu0
  %v667 = vadd.f32 0.0, %v666
  %668 = vmatprep.mubr.f32.mxu0 0.0
  %669 = vmatmul.mubr.f32.gmra.mxu0 %v453
  %v670 = vpop.f32.mrf.mxu0
  %v671 = vadd.f32 0.0, %v670
  %v672 = vpop.f32.mrf.mxu0
  %v673 = vadd.f32 0.0, %v672
  %674 = vmatprep.mubr.f32.mxu0 0.0
  %675 = vmatmul.mubr.f32.gmra.mxu0 %v456
  %v676 = vpop.f32.mrf.mxu0
  %v677 = vadd.f32 0.0, %v676
  %v678 = vpop.f32.mrf.mxu0
  %v679 = vadd.f32 0.0, %v678
  %680 = vmatprep.mubr.f32.mxu0 0.0
  %681 = vmatmul.mubr.f32.gmra.mxu0 %v459
  %v682 = vpop.f32.mrf.mxu0
  %v683 = vadd.f32 0.0, %v682
  %v684 = vpop.f32.mrf.mxu0
  %v685 = vadd.f32 0.0, %v684
  %686 = vdwg.mxu0
  %v687 = vadd.f32 %v528, %v530
  %v688 = vadd.f32 %v687, %v641
  %v689 = vadd.f32 %v688, %v643
  %690 = vadd.xlane.f32.xlu0 %v689
  %v691 = vpop.xlane.xlu0 %690
  %v692 = vadd.f32 %v534, %v536
  %v693 = vadd.f32 %v692, %v647
  %v694 = vadd.f32 %v693, %v649
  %695 = vadd.xlane.f32.xlu0 %v694
  %v696 = vpop.xlane.xlu0 %695
  %v697 = vadd.f32 %v540, %v542
  %v698 = vadd.f32 %v697, %v653
  %v699 = vadd.f32 %v698, %v655
  %700 = vadd.xlane.f32.xlu0 %v699
  %v701 = vpop.xlane.xlu0 %700
  %v702 = vadd.f32 %v546, %v548
  %v703 = vadd.f32 %v702, %v659
  %v704 = vadd.f32 %v703, %v661
  %705 = vadd.xlane.f32.xlu0 %v704
  %v706 = vpop.xlane.xlu0 %705
  %v707 = vadd.f32 %v552, %v554
  %v708 = vadd.f32 %v707, %v665
  %v709 = vadd.f32 %v708, %v667
  %710 = vadd.xlane.f32.xlu0 %v709
  %v711 = vpop.xlane.xlu0 %710
  %v712 = vadd.f32 %v558, %v560
  %v713 = vadd.f32 %v712, %v671
  %v714 = vadd.f32 %v713, %v673
  %715 = vadd.xlane.f32.xlu0 %v714
  %v716 = vpop.xlane.xlu0 %715
  %v717 = vadd.f32 %v564, %v566
  %v718 = vadd.f32 %v717, %v677
  %v719 = vadd.f32 %v718, %v679
  %720 = vadd.xlane.f32.xlu0 %v719
  %v721 = vpop.xlane.xlu0 %720
  %v722 = vadd.f32 %v570, %v572
  %v723 = vadd.f32 %v722, %v683
  %v724 = vadd.f32 %v723, %v685
  %725 = vadd.xlane.f32.xlu0 %v724
  %v726 = vpop.xlane.xlu0 %725
  %v727 = vmul.f32 %v528, %v528
  %v728 = vmul.f32 %v530, %v530
  %v729 = vmul.f32 %v641, %v641
  %v730 = vmul.f32 %v643, %v643
  %v731 = vmul.f32 %v534, %v534
  %v732 = vmul.f32 %v536, %v536
  %v733 = vmul.f32 %v647, %v647
  %v734 = vmul.f32 %v649, %v649
  %v735 = vmul.f32 %v540, %v540
  %v736 = vmul.f32 %v542, %v542
  %v737 = vmul.f32 %v653, %v653
  %v738 = vmul.f32 %v655, %v655
  %v739 = vmul.f32 %v546, %v546
  %v740 = vmul.f32 %v548, %v548
  %v741 = vmul.f32 %v659, %v659
  %v742 = vmul.f32 %v661, %v661
  %v743 = vmul.f32 %v552, %v552
  %v744 = vmul.f32 %v554, %v554
  %v745 = vmul.f32 %v665, %v665
  %v746 = vmul.f32 %v667, %v667
  %v747 = vmul.f32 %v558, %v558
  %v748 = vmul.f32 %v560, %v560
  %v749 = vmul.f32 %v671, %v671
  %v750 = vmul.f32 %v673, %v673
  %v751 = vmul.f32 %v564, %v564
  %v752 = vmul.f32 %v566, %v566
  %v753 = vmul.f32 %v677, %v677
  %v754 = vmul.f32 %v679, %v679
  %v755 = vmul.f32 %v570, %v570
  %v756 = vmul.f32 %v572, %v572
  %v757 = vmul.f32 %v683, %v683
  %v758 = vmul.f32 %v685, %v685
  %v759 = vadd.f32 %v727, %v728
  %v760 = vadd.f32 %v759, %v729
  %v761 = vadd.f32 %v760, %v730
  %762 = vadd.xlane.f32.xlu0 %v761
  %v763 = vpop.xlane.xlu0 %762
  %v764 = vadd.f32 %v731, %v732
  %v765 = vadd.f32 %v764, %v733
  %v766 = vadd.f32 %v765, %v734
  %767 = vadd.xlane.f32.xlu0 %v766
  %v768 = vpop.xlane.xlu0 %767
  %v769 = vadd.f32 %v735, %v736
  %v770 = vadd.f32 %v769, %v737
  %v771 = vadd.f32 %v770, %v738
  %772 = vadd.xlane.f32.xlu0 %v771
  %v773 = vpop.xlane.xlu0 %772
  %v774 = vadd.f32 %v739, %v740
  %v775 = vadd.f32 %v774, %v741
  %v776 = vadd.f32 %v775, %v742
  %777 = vadd.xlane.f32.xlu0 %v776
  %v778 = vpop.xlane.xlu0 %777
  %v779 = vadd.f32 %v743, %v744
  %v780 = vadd.f32 %v779, %v745
  %v781 = vadd.f32 %v780, %v746
  %782 = vadd.xlane.f32.xlu0 %v781
  %v783 = vpop.xlane.xlu0 %782
  %v784 = vadd.f32 %v747, %v748
  %v785 = vadd.f32 %v784, %v749
  %v786 = vadd.f32 %v785, %v750
  %787 = vadd.xlane.f32.xlu0 %v786
  %v788 = vpop.xlane.xlu0 %787
  %v789 = vadd.f32 %v751, %v752
  %v790 = vadd.f32 %v789, %v753
  %v791 = vadd.f32 %v790, %v754
  %792 = vadd.xlane.f32.xlu0 %v791
  %v793 = vpop.xlane.xlu0 %792
  %v794 = vadd.f32 %v755, %v756
  %v795 = vadd.f32 %v794, %v757
  %v796 = vadd.f32 %v795, %v758
  %797 = vadd.xlane.f32.xlu0 %v796
  %v798 = vpop.xlane.xlu0 %797
  %v799 = vmul.f32 %v691, 0.001953125
  %v800 = vmul.f32 %v696, 0.001953125
  %v801 = vmul.f32 %v701, 0.001953125
  %v802 = vmul.f32 %v706, 0.001953125
  %v803 = vmul.f32 %v711, 0.001953125
  %v804 = vmul.f32 %v716, 0.001953125
  %v805 = vmul.f32 %v721, 0.001953125
  %v806 = vmul.f32 %v726, 0.001953125
  %v807 = vmul.f32 %v763, 0.001953125
  %v808 = vmul.f32 %v768, 0.001953125
  %v809 = vmul.f32 %v773, 0.001953125
  %v810 = vmul.f32 %v778, 0.001953125
  %v811 = vmul.f32 %v783, 0.001953125
  %v812 = vmul.f32 %v788, 0.001953125
  %v813 = vmul.f32 %v793, 0.001953125
  %v814 = vmul.f32 %v798, 0.001953125
  %v815 = vmul.f32 %v799, %v799
  %v816 = vmul.f32 %v800, %v800
  %v817 = vmul.f32 %v801, %v801
  %v818 = vmul.f32 %v802, %v802
  %v819 = vmul.f32 %v803, %v803
  %v820 = vmul.f32 %v804, %v804
  %v821 = vmul.f32 %v805, %v805
  %v822 = vmul.f32 %v806, %v806
  %v823 = vsub.f32 %v807, %v815
  %v824 = vsub.f32 %v808, %v816
  %v825 = vsub.f32 %v809, %v817
  %v826 = vsub.f32 %v810, %v818
  %v827 = vsub.f32 %v811, %v819
  %v828 = vsub.f32 %v812, %v820
  %v829 = vsub.f32 %v813, %v821
  %v830 = vsub.f32 %v814, %v822
  %v831 = vmax.f32 %v823, 0.0
  %v832 = vmax.f32 %v824, 0.0
  %v833 = vmax.f32 %v825, 0.0
  %v834 = vmax.f32 %v826, 0.0
  %v835 = vmax.f32 %v827, 0.0
  %v836 = vmax.f32 %v828, 0.0
  %v837 = vmax.f32 %v829, 0.0
  %v838 = vmax.f32 %v830, 0.0
  %v839 = vld [vmem:[%s5] sm:$0xff]
  %v840 = vld [vmem:[%s5 + $0x8] sm:$0xff]
  %v841 = vld [vmem:[%s5 + $0x10] sm:$0xff]
  %v842 = vld [vmem:[%s5 + $0x18] sm:$0xff]
  %v843 = vld [vmem:[%s5 + $0x20] sm:$0xff]
  %v844 = vld [vmem:[%s5 + $0x28] sm:$0xff]
  %v845 = vld [vmem:[%s5 + $0x30] sm:$0xff]
  %v846 = vld [vmem:[%s5 + $0x38] sm:$0xff]
  %v847 = vadd.f32 %v831, 1e-05
  %v848 = vadd.f32 %v832, 1e-05
  %v849 = vadd.f32 %v833, 1e-05
  %v850 = vadd.f32 %v834, 1e-05
  %v851 = vadd.f32 %v835, 1e-05
  %v852 = vadd.f32 %v836, 1e-05
  %v853 = vadd.f32 %v837, 1e-05
  %v854 = vadd.f32 %v838, 1e-05
  %v855 = vrsqrt.pop %v847
  %v856 = vrsqrt.pop %v848
  %v857 = vrsqrt.pop %v849
  %v858 = vrsqrt.pop %v850
  %v859 = vrsqrt.pop %v851
  %v860 = vrsqrt.pop %v852
  %v861 = vrsqrt.pop %v853
  %v862 = vrsqrt.pop %v854
  %v863 = vmul.f32 %v839, %v855
  %v864 = vmul.f32 %v840, %v856
  %v865 = vmul.f32 %v841, %v857
  %v866 = vmul.f32 %v842, %v858
  %v867 = vmul.f32 %v843, %v859
  %v868 = vmul.f32 %v844, %v860
  %v869 = vmul.f32 %v845, %v861
  %v870 = vmul.f32 %v846, %v862
  %v871 = vld [vmem:[%s6] sm:$0xff]
  %v872 = vld [vmem:[%s6 + $0x8] sm:$0xff]
  %v873 = vld [vmem:[%s6 + $0x10] sm:$0xff]
  %v874 = vld [vmem:[%s6 + $0x18] sm:$0xff]
  %v875 = vld [vmem:[%s6 + $0x20] sm:$0xff]
  %v876 = vld [vmem:[%s6 + $0x28] sm:$0xff]
  %v877 = vld [vmem:[%s6 + $0x30] sm:$0xff]
  %v878 = vld [vmem:[%s6 + $0x38] sm:$0xff]
  %v879 = vmul.f32 %v799, %v863
  %v880 = vmul.f32 %v800, %v864
  %v881 = vmul.f32 %v801, %v865
  %v882 = vmul.f32 %v802, %v866
  %v883 = vmul.f32 %v803, %v867
  %v884 = vmul.f32 %v804, %v868
  %v885 = vmul.f32 %v805, %v869
  %v886 = vmul.f32 %v806, %v870
  %v887 = vsub.f32 %v871, %v879
  %v888 = vsub.f32 %v872, %v880
  %v889 = vsub.f32 %v873, %v881
  %v890 = vsub.f32 %v874, %v882
  %v891 = vsub.f32 %v875, %v883
  %v892 = vsub.f32 %v876, %v884
  %v893 = vsub.f32 %v877, %v885
  %v894 = vsub.f32 %v878, %v886
  %v895 = vmax.f32 %v528, %v530
  %896 = vmax.xlane.f32.xlu0 %v895
  %v897 = vpop.xlane.xlu0 %896
  %v898 = vmax.f32 %v534, %v536
  %899 = vmax.xlane.f32.xlu0 %v898
  %v900 = vpop.xlane.xlu0 %899
  %v901 = vmax.f32 %v540, %v542
  %902 = vmax.xlane.f32.xlu0 %v901
  %v903 = vpop.xlane.xlu0 %902
  %v904 = vmax.f32 %v546, %v548
  %905 = vmax.xlane.f32.xlu0 %v904
  %v906 = vpop.xlane.xlu0 %905
  %v907 = vmax.f32 %v552, %v554
  %908 = vmax.xlane.f32.xlu0 %v907
  %v909 = vpop.xlane.xlu0 %908
  %v910 = vmax.f32 %v558, %v560
  %911 = vmax.xlane.f32.xlu0 %v910
  %v912 = vpop.xlane.xlu0 %911
  %v913 = vmax.f32 %v564, %v566
  %914 = vmax.xlane.f32.xlu0 %v913
  %v915 = vpop.xlane.xlu0 %914
  %v916 = vmax.f32 %v570, %v572
  %917 = vmax.xlane.f32.xlu0 %v916
  %v918 = vpop.xlane.xlu0 %917
  %v919 = vmin.f32 %v528, %v530
  %920 = vmin.xlane.f32.xlu0 %v919
  %v921 = vpop.xlane.xlu0 %920
  %v922 = vmin.f32 %v534, %v536
  %923 = vmin.xlane.f32.xlu0 %v922
  %v924 = vpop.xlane.xlu0 %923
  %v925 = vmin.f32 %v540, %v542
  %926 = vmin.xlane.f32.xlu0 %v925
  %v927 = vpop.xlane.xlu0 %926
  %v928 = vmin.f32 %v546, %v548
  %929 = vmin.xlane.f32.xlu0 %v928
  %v930 = vpop.xlane.xlu0 %929
  %v931 = vmin.f32 %v552, %v554
  %932 = vmin.xlane.f32.xlu0 %v931
  %v933 = vpop.xlane.xlu0 %932
  %v934 = vmin.f32 %v558, %v560
  %935 = vmin.xlane.f32.xlu0 %v934
  %v936 = vpop.xlane.xlu0 %935
  %v937 = vmin.f32 %v564, %v566
  %938 = vmin.xlane.f32.xlu0 %v937
  %v939 = vpop.xlane.xlu0 %938
  %v940 = vmin.f32 %v570, %v572
  %941 = vmin.xlane.f32.xlu0 %v940
  %v942 = vpop.xlane.xlu0 %941
  %vm943 = vcmp.ge.f32.partialorder %v863, 0.0
  %vm944 = vcmp.ge.f32.partialorder %v864, 0.0
  %vm945 = vcmp.ge.f32.partialorder %v865, 0.0
  %vm946 = vcmp.ge.f32.partialorder %v866, 0.0
  %vm947 = vcmp.ge.f32.partialorder %v867, 0.0
  %vm948 = vcmp.ge.f32.partialorder %v868, 0.0
  %vm949 = vcmp.ge.f32.partialorder %v869, 0.0
  %vm950 = vcmp.ge.f32.partialorder %v870, 0.0
  %v951 = vmul.f32 %v863, %v897
  %v952 = vmul.f32 %v864, %v900
  %v953 = vmul.f32 %v865, %v903
  %v954 = vmul.f32 %v866, %v906
  %v955 = vmul.f32 %v867, %v909
  %v956 = vmul.f32 %v868, %v912
  %v957 = vmul.f32 %v869, %v915
  %v958 = vmul.f32 %v870, %v918
  %v959 = vmul.f32 %v863, %v921
  %v960 = vmul.f32 %v864, %v924
  %v961 = vmul.f32 %v865, %v927
  %v962 = vmul.f32 %v866, %v930
  %v963 = vmul.f32 %v867, %v933
  %v964 = vmul.f32 %v868, %v936
  %v965 = vmul.f32 %v869, %v939
  %v966 = vmul.f32 %v870, %v942
  %v967 = vsel %vm943, %v951, %v959
  %v968 = vsel %vm944, %v952, %v960
  %v969 = vsel %vm945, %v953, %v961
  %v970 = vsel %vm946, %v954, %v962
  %v971 = vsel %vm947, %v955, %v963
  %v972 = vsel %vm948, %v956, %v964
  %v973 = vsel %vm949, %v957, %v965
  %v974 = vsel %vm950, %v958, %v966
  %v975 = vadd.f32 %v967, %v887
  %v976 = vadd.f32 %v968, %v888
  %v977 = vadd.f32 %v969, %v889
  %v978 = vadd.f32 %v970, %v890
  %v979 = vadd.f32 %v971, %v891
  %v980 = vadd.f32 %v972, %v892
  %v981 = vadd.f32 %v973, %v893
  %v982 = vadd.f32 %v974, %v894
  %v983 = vmax.f32 %v975, 0.0
  %v984 = vmax.f32 %v976, 0.0
  %v985 = vmax.f32 %v977, 0.0
  %v986 = vmax.f32 %v978, 0.0
  %v987 = vmax.f32 %v979, 0.0
  %v988 = vmax.f32 %v980, 0.0
  %v989 = vmax.f32 %v981, 0.0
  %v990 = vmax.f32 %v982, 0.0
  %vm991 = vcmask 7168
  %992 = vst.msk [vmem:[%s7] sm:$0xff] %vm991, %v983
  %993 = vst.msk [vmem:[%s7 + $0x8] sm:$0xff] %vm991, %v984
  %994 = vst.msk [vmem:[%s7 + $0x10] sm:$0xff] %vm991, %v985
  %995 = vst.msk [vmem:[%s7 + $0x18] sm:$0xff] %vm991, %v986
  %996 = vst.msk [vmem:[%s7 + $0x20] sm:$0xff] %vm991, %v987
  %997 = vst.msk [vmem:[%s7 + $0x28] sm:$0xff] %vm991, %v988
  %998 = vst.msk [vmem:[%s7 + $0x30] sm:$0xff] %vm991, %v989
  %999 = vst.msk [vmem:[%s7 + $0x38] sm:$0xff] %vm991, %v990
  %v1000 = vmax.f32 %v641, %v643
  %1001 = vmax.xlane.f32.xlu0 %v1000
  %v1002 = vpop.xlane.xlu0 %1001
  %v1003 = vmax.f32 %v647, %v649
  %1004 = vmax.xlane.f32.xlu0 %v1003
  %v1005 = vpop.xlane.xlu0 %1004
  %v1006 = vmax.f32 %v653, %v655
  %1007 = vmax.xlane.f32.xlu0 %v1006
  %v1008 = vpop.xlane.xlu0 %1007
  %v1009 = vmax.f32 %v659, %v661
  %1010 = vmax.xlane.f32.xlu0 %v1009
  %v1011 = vpop.xlane.xlu0 %1010
  %v1012 = vmax.f32 %v665, %v667
  %1013 = vmax.xlane.f32.xlu0 %v1012
  %v1014 = vpop.xlane.xlu0 %1013
  %v1015 = vmax.f32 %v671, %v673
  %1016 = vmax.xlane.f32.xlu0 %v1015
  %v1017 = vpop.xlane.xlu0 %1016
  %v1018 = vmax.f32 %v677, %v679
  %1019 = vmax.xlane.f32.xlu0 %v1018
  %v1020 = vpop.xlane.xlu0 %1019
  %v1021 = vmax.f32 %v683, %v685
  %1022 = vmax.xlane.f32.xlu0 %v1021
  %v1023 = vpop.xlane.xlu0 %1022
  %v1024 = vmin.f32 %v641, %v643
  %1025 = vmin.xlane.f32.xlu0 %v1024
  %v1026 = vpop.xlane.xlu0 %1025
  %v1027 = vmin.f32 %v647, %v649
  %1028 = vmin.xlane.f32.xlu0 %v1027
  %v1029 = vpop.xlane.xlu0 %1028
  %v1030 = vmin.f32 %v653, %v655
  %1031 = vmin.xlane.f32.xlu0 %v1030
  %v1032 = vpop.xlane.xlu0 %1031
  %v1033 = vmin.f32 %v659, %v661
  %1034 = vmin.xlane.f32.xlu0 %v1033
  %v1035 = vpop.xlane.xlu0 %1034
  %v1036 = vmin.f32 %v665, %v667
  %1037 = vmin.xlane.f32.xlu0 %v1036
  %v1038 = vpop.xlane.xlu0 %1037
  %v1039 = vmin.f32 %v671, %v673
  %1040 = vmin.xlane.f32.xlu0 %v1039
  %v1041 = vpop.xlane.xlu0 %1040
  %v1042 = vmin.f32 %v677, %v679
  %1043 = vmin.xlane.f32.xlu0 %v1042
  %v1044 = vpop.xlane.xlu0 %1043
  %v1045 = vmin.f32 %v683, %v685
  %1046 = vmin.xlane.f32.xlu0 %v1045
  %v1047 = vpop.xlane.xlu0 %1046
  %v1048 = vmul.f32 %v863, %v1002
  %v1049 = vmul.f32 %v864, %v1005
  %v1050 = vmul.f32 %v865, %v1008
  %v1051 = vmul.f32 %v866, %v1011
  %v1052 = vmul.f32 %v867, %v1014
  %v1053 = vmul.f32 %v868, %v1017
  %v1054 = vmul.f32 %v869, %v1020
  %v1055 = vmul.f32 %v870, %v1023
  %v1056 = vmul.f32 %v863, %v1026
  %v1057 = vmul.f32 %v864, %v1029
  %v1058 = vmul.f32 %v865, %v1032
  %v1059 = vmul.f32 %v866, %v1035
  %v1060 = vmul.f32 %v867, %v1038
  %v1061 = vmul.f32 %v868, %v1041
  %v1062 = vmul.f32 %v869, %v1044
  %v1063 = vmul.f32 %v870, %v1047
  %v1064 = vsel %vm943, %v1048, %v1056
  %v1065 = vsel %vm944, %v1049, %v1057
  %v1066 = vsel %vm945, %v1050, %v1058
  %v1067 = vsel %vm946, %v1051, %v1059
  %v1068 = vsel %vm947, %v1052, %v1060
  %v1069 = vsel %vm948, %v1053, %v1061
  %v1070 = vsel %vm949, %v1054, %v1062
  %v1071 = vsel %vm950, %v1055, %v1063
  %v1072 = vadd.f32 %v1064, %v887
  %v1073 = vadd.f32 %v1065, %v888
  %v1074 = vadd.f32 %v1066, %v889
  %v1075 = vadd.f32 %v1067, %v890
  %v1076 = vadd.f32 %v1068, %v891
  %v1077 = vadd.f32 %v1069, %v892
  %v1078 = vadd.f32 %v1070, %v893
  %v1079 = vadd.f32 %v1071, %v894
  %v1080 = vmax.f32 %v1072, 0.0
  %v1081 = vmax.f32 %v1073, 0.0
  %v1082 = vmax.f32 %v1074, 0.0
  %v1083 = vmax.f32 %v1075, 0.0
  %v1084 = vmax.f32 %v1076, 0.0
  %v1085 = vmax.f32 %v1077, 0.0
  %v1086 = vmax.f32 %v1078, 0.0
  %v1087 = vmax.f32 %v1079, 0.0
  %1096 = vrot.lane.b32.xlu0 %v1080, 1
  %v1097 = vpop.permute.xlu0 %1096
  %1098 = vrot.lane.b32.xlu0 %v1081, 1
  %v1099 = vpop.permute.xlu0 %1098
  %1100 = vrot.lane.b32.xlu0 %v1082, 1
  %v1101 = vpop.permute.xlu0 %1100
  %1102 = vrot.lane.b32.xlu0 %v1083, 1
  %v1103 = vpop.permute.xlu0 %1102
  %1104 = vrot.lane.b32.xlu0 %v1084, 1
  %v1105 = vpop.permute.xlu0 %1104
  %1106 = vrot.lane.b32.xlu0 %v1085, 1
  %v1107 = vpop.permute.xlu0 %1106
  %1108 = vrot.lane.b32.xlu0 %v1086, 1
  %v1109 = vpop.permute.xlu0 %1108
  %1110 = vrot.lane.b32.xlu0 %v1087, 1
  %v1111 = vpop.permute.xlu0 %1110
  %vm1120 = vcmask 15368
  %1121 = vst.msk [vmem:[%s7] sm:$0xff] %vm1120, %v1097
  %1122 = vst.msk [vmem:[%s7 + $0x8] sm:$0xff] %vm1120, %v1099
  %1123 = vst.msk [vmem:[%s7 + $0x10] sm:$0xff] %vm1120, %v1101
  %1124 = vst.msk [vmem:[%s7 + $0x18] sm:$0xff] %vm1120, %v1103
  %1125 = vst.msk [vmem:[%s7 + $0x20] sm:$0xff] %vm1120, %v1105
  %1126 = vst.msk [vmem:[%s7 + $0x28] sm:$0xff] %vm1120, %v1107
  %1127 = vst.msk [vmem:[%s7 + $0x30] sm:$0xff] %vm1120, %v1109
  %1128 = vst.msk [vmem:[%s7 + $0x38] sm:$0xff] %vm1120, %v1111
  // Predicated region
  $region30: #{tpu_custom_call.1} parent=0 // pred_check
    _
  $region31: #{tpu_custom_call.1} parent=0 // pred_check_branch
    %1130 = sbr.rel (0) target = $region33
  $region32: #{tpu_custom_call.1} parent=0 // pred_region
    _
  $region33: #{tpu_custom_call.1} parent=0 // pred_fallthru
    _
  // Predicated region
  $region34: #{tpu_custom_call.1} parent=0 // pred_check
    _
  $region35: #{tpu_custom_call.1} parent=0 // pred_check_branch
    %1132 = sbr.rel (0) target = $region37
  $region36: #{tpu_custom_call.1} parent=0 // pred_region
    _
  $region37: #{tpu_custom_call.1} parent=0 // pred_fallthru
    _

</llo_original>
